<compile_context>
chip_gen: v7x
topology: tpu7x:2x2x1
jax: 0.10.0
libtpu: 0.0.40
codegen_flags: <defaults>
</compile_context>

<pallas_src>
import jax
import jax.numpy as jnp
from jax.experimental import pallas as pl
from jax.experimental.pallas import tpu as pltpu

LANE = 128                     # lanes per vreg row
SUBLANE = 8                    # sublane alignment for 2-D blocks
ALIGN_1D = LANE * SUBLANE      # 1024-element alignment for 1-D blocks

# ~4 MiB per stream per pipeline buffer.  3 streams x 2 buffers = 24 MiB,
# which (with the explicit vmem_limit_bytes below) fits v5e/v6e (128 MiB
# physical VMEM) and v7x (64 MiB physical).
TARGET_TILE_BYTES = 4 * 1024 * 1024
# Inputs at least this big are split into >= 2 grid steps so both v7x
# TensorCores get work; the extra ~0.35 us step is noise on 1-TC chips.
MIN_SPLIT_BYTES = 1024 * 1024


def _round_up(x, m):
    return ((x + m - 1) // m) * m


def _gate_kernel(gate_ref, a_ref, b_ref, o_ref):
    # gate lives in SMEM as a single float32 scalar; cast once to the
    # activation dtype (keeps bf16 math in bf16 on v6e/v7x).
    g = gate_ref[0].astype(o_ref.dtype)
    a = a_ref[...]
    b = b_ref[...]
    # out = a*g + b*(1-g)  ==  b + (a - b)*g   (one sub + one FMA)
    o_ref[...] = (b + (a - b) * g).astype(o_ref.dtype)


def gate_forward(a, b, gate, *, max_tile_bytes=TARGET_TILE_BYTES):
    """out = a * gate + b * (1 - gate) via a Pallas TPU kernel.

    a, b : arrays of identical shape/dtype.
    gate : scalar parameter (shape (1,) or ()), kept in float32 (like the
           PyTorch nn.Parameter).
    """
    assert a.shape == b.shape and a.dtype == b.dtype
    orig_shape = a.shape
    n = a.size
    itemsize = a.dtype.itemsize

    gate_smem = jnp.asarray(gate, dtype=jnp.float32).reshape(1)
    flat_a = a.reshape(-1)      # contiguous -> free bitcast, no copy
    flat_b = b.reshape(-1)

    if n % LANE == 0:
        # ---------- aligned path: lane-dense (rows, 128) 2-D slab ----------
        rows = n // LANE
        row_bytes = LANE * itemsize
        max_rows = max(SUBLANE, (max_tile_bytes // row_bytes) // SUBLANE * SUBLANE)
        if rows <= max_rows:
            block_rows = rows                               # full extent
            if n * itemsize >= MIN_SPLIT_BYTES:
                # two blocks -> one per v7x TensorCore
                block_rows = _round_up(pl.cdiv(rows, 2), SUBLANE)
        else:
            block_rows = max_rows
        grid = (pl.cdiv(rows, block_rows),)
        args = (flat_a.reshape(rows, LANE), flat_b.reshape(rows, LANE))
        blk = (block_rows, LANE)
        idx = lambda i: (i, 0)
        out_shape = jax.ShapeDtypeStruct((rows, LANE), a.dtype)
        tile_bytes = block_rows * row_bytes
    else:
        # ---------- ragged path: 1-D flat, partial last block masked ----------
        # Zero-copy: no jnp.pad of the inputs and no out[:n] slice of the
        # output; Pallas clips the final block's read/write DMAs.
        max_elems = max(ALIGN_1D,
                        (max_tile_bytes // itemsize) // ALIGN_1D * ALIGN_1D)
        if n <= max_elems:
            block_elems = n                                 # full extent
            if n * itemsize >= MIN_SPLIT_BYTES:
                block_elems = _round_up(pl.cdiv(n, 2), ALIGN_1D)
        else:
            block_elems = max_elems
        grid = (pl.cdiv(n, block_elems),)
        args = (flat_a, flat_b)
        blk = (block_elems,)
        idx = lambda i: (i,)
        out_shape = jax.ShapeDtypeStruct((n,), a.dtype)
        tile_bytes = block_elems * itemsize

    # Explicit VMEM budget: 3 streams x 2 pipeline buffers x tile + headroom,
    # clamped so it is safe on every generation (v7x physical VMEM = 64 MiB).
    vmem_limit = min(max(3 * 2 * tile_bytes + 4 * 1024 * 1024,
                         16 * 1024 * 1024),
                     32 * 1024 * 1024)

    out = pl.pallas_call(
        _gate_kernel,
        out_shape=out_shape,
        grid=grid,
        in_specs=[
            pl.BlockSpec(memory_space=pltpu.SMEM),          # gate scalar
            pl.BlockSpec(blk, idx),                         # a tile
            pl.BlockSpec(blk, idx),                         # b tile
        ],
        out_specs=pl.BlockSpec(blk, idx),
        compiler_params=pltpu.CompilerParams(
            dimension_semantics=("parallel",),
            vmem_limit_bytes=vmem_limit,
        ),
        cost_estimate=pl.CostEstimate(
            flops=2 * n, transcendentals=0, bytes_accessed=3 * n * itemsize),
    )(gate_smem, *args)

    return out.reshape(orig_shape)


def _check(a, b, gate, atol=1e-5, rtol=1e-5, **kw):
    out = gate_forward(a, b, gate, **kw)
    jax.block_until_ready(out)
    g = jnp.asarray(gate, jnp.float32).reshape(())
    ref = (a.astype(jnp.float32) * g + b.astype(jnp.float32) * (1.0 - g)).astype(a.dtype)
    assert out.shape == a.shape, (out.shape, a.shape)
    assert out.dtype == a.dtype, (out.dtype, a.dtype)
    assert jnp.allclose(out.astype(jnp.float32), ref.astype(jnp.float32),
                        atol=atol, rtol=rtol), "mismatch vs reference"
    return out


if __name__ == "__main__":
    key = jax.random.PRNGKey(0)
    k = jax.random.split(key, 8)

    # Deterministic parameter init, matching nn.Parameter(torch.Tensor([1])).
    gate1 = jnp.array([1.0], dtype=jnp.float32)
    gate2 = jnp.array([0.3], dtype=jnp.float32)

    # 1) Small NCHW-like shape (aligned path, single full-extent block).
    a = jax.random.normal(k[0], (2, 4, 16, 16), dtype=jnp.float32)
    b = jax.random.normal(k[1], (2, 4, 16, 16), dtype=jnp.float32)
    _check(a, b, gate1)

    # 2) Ragged flat size (zero-copy 1-D path, single full-extent block).
    a2 = jax.random.normal(k[2], (3, 5, 7, 11), dtype=jnp.float32)
    b2 = jax.random.normal(k[3], (3, 5, 7, 11), dtype=jnp.float32)
    _check(a2, b2, gate2)

    # 3) >1 MiB aligned input: split into 2 blocks (one per v7x TensorCore),
    #    exercises a partial 2-D row block as well.
    a3 = jax.random.normal(k[4], (2, 8, 129, 128), dtype=jnp.float32)
    b3 = jax.random.normal(k[5], (2, 8, 129, 128), dtype=jnp.float32)
    _check(a3, b3, gate2)

    # 4) Ragged input with a tiny tile override: forces a masked partial last
    #    1-D block (block=1024 over n=1155) without touching any large shape.
    _check(a2, b2, gate2, max_tile_bytes=4096)

    # 5) bf16 activations (kernel computes in bf16; loose tolerance).
    a5 = jax.random.normal(k[6], (2, 4, 16, 16), dtype=jnp.bfloat16)
    b5 = jax.random.normal(k[7], (2, 4, 16, 16), dtype=jnp.bfloat16)
    _check(a5, b5, gate2, atol=1e-1, rtol=5e-2)

    print("KERNEL_OK")
</pallas_src>

<mosaic_0001>
module attributes {stable_mosaic.version = 11 : i64} {
  func.func @_gate_kernel(%arg0: i32, %arg1: memref<1xf32, #tpu.memory_space<smem>>, %arg2: memref<16x128xf32, #tpu.memory_space<vmem>>, %arg3: memref<16x128xf32, #tpu.memory_space<vmem>>, %arg4: memref<16x128xf32, #tpu.memory_space<vmem>>) attributes {dimension_semantics = [#tpu.dimension_semantics<parallel>], iteration_bounds = array<i64: 1>, scalar_prefetch = 0 : i64, scratch_operands = 0 : i64, tpu.core_type = #tpu.core_type<tc>, window_params = [{transform_indices = @transform_0, window_bounds = array<i64: 1>}, {transform_indices = @transform_1, window_bounds = array<i64: 16, 128>}, {transform_indices = @transform_2, window_bounds = array<i64: 16, 128>}, {transform_indices = @transform_3, window_bounds = array<i64: 16, 128>}]} {
    %c0 = arith.constant 0 : index
    %0 = memref.load %arg1[%c0] : memref<1xf32, #tpu.memory_space<smem>>
    %c0_0 = arith.constant 0 : index
    %c0_1 = arith.constant 0 : index
    %1 = vector.load %arg2[%c0_0, %c0_1] : memref<16x128xf32, #tpu.memory_space<vmem>>, vector<16x128xf32>
    %c0_2 = arith.constant 0 : index
    %c0_3 = arith.constant 0 : index
    %2 = vector.load %arg3[%c0_2, %c0_3] : memref<16x128xf32, #tpu.memory_space<vmem>>, vector<16x128xf32>
    %3 = arith.subf %1, %2 : vector<16x128xf32>
    %4 = vector.broadcast %0 : f32 to vector<16x128xf32>
    %5 = arith.mulf %3, %4 : vector<16x128xf32>
    %6 = arith.addf %2, %5 : vector<16x128xf32>
    %c0_4 = arith.constant 0 : index
    %c0_5 = arith.constant 0 : index
    %7 = vector.load %arg4[%c0_4, %c0_5] : memref<16x128xf32, #tpu.memory_space<vmem>>, vector<16x128xf32>
    tpu.vector_store %arg4[%c0_4, %c0_5], %6 {strides = array<i32>} : memref<16x128xf32, #tpu.memory_space<vmem>>, vector<16x128xf32>,
    return
  }
  func.func @transform_0(%arg0: i32) -> i32 {
    %c0_i32 = arith.constant 0 : i32
    %c0_i32_0 = arith.constant 0 : i32
    return %c0_i32 : i32
  }
  func.func @transform_1(%arg0: i32) -> (i32, i32) {
    %c0_i32 = arith.constant 0 : i32
    %c0_i32_0 = arith.constant 0 : i32
    return %arg0, %c0_i32 : i32, i32
  }
  func.func @transform_2(%arg0: i32) -> (i32, i32) {
    %c0_i32 = arith.constant 0 : i32
    %c0_i32_0 = arith.constant 0 : i32
    return %arg0, %c0_i32 : i32, i32
  }
  func.func @transform_3(%arg0: i32) -> (i32, i32) {
    %c0_i32 = arith.constant 0 : i32
    %c0_i32_0 = arith.constant 0 : i32
    return %arg0, %c0_i32 : i32, i32
  }
}

</mosaic_0001>

<llo_original>
// kernel: tpu_custom_call.1
$region0: #{tpu_custom_call.1}
  #allocation0 [shape = 'u32[]', space=smem, size = 0x4, offset = 0x4, fixed_abs, tag = 'smem constant byte address 0x4 - core index']
  #allocation1 [shape = 'u32[144,128]{1,0:T(1,128)}', space=vmem, size = 0x12000, scoped, tag = 'internal scratch']
  #allocation2 [shape = 'f32[1]{0:T(128)S(6)}', space=smem, size = 0x200, scoped, tag = 'scoped memory for tpu_custom_call.1']
  %s0 = inlined_call_operand.<no memory space> [shape: f32[1], index: 0, kind: input, shape index: {}]
  %s1 = inlined_call_operand.hbm [shape: f32[16,128], index: 1, kind: input, shape index: {}]
  %s2 = inlined_call_operand.hbm [shape: f32[16,128], index: 2, kind: input, shape index: {}]
  %s3 = inlined_call_operand.hbm [shape: f32[16,128], index: 3, kind: output, shape index: {}]
  %s4 = sld [smem:[#allocation0]]
  $region30: #{tpu_custom_call.1} parent=0
    _
  %s6 = ssub.s32 1, %s4
  %s7 = scalar_select 0, %s6, %s4
  %8 = sst [smem:[#allocation2]] %s0
  $region1: #{tpu_custom_call.1} parent=0
    #allocation3 [shape = 'u8[8192]{0}', space=vmem, size = 0x2000, scoped, tag = 'input window, operand 1, single buffered']
    #allocation4 [shape = 's32[1]{0}', space=sflag, size = 0x4, scoped, tag = 'scoped memory for tpu_custom_call.1']
    #allocation5 [shape = 's32[1]{0}', space=sflag, size = 0x4, scoped, tag = 'scoped memory for tpu_custom_call.1']
    #allocation6 [shape = 'u8[8192]{0}', space=vmem, size = 0x2000, scoped, tag = 'input window, operand 2, single buffered']
    #allocation7 [shape = 's32[1]{0}', space=sflag, size = 0x4, scoped, tag = 'scoped memory for tpu_custom_call.1']
    #allocation8 [shape = 'u8[8192]{0}', space=vmem, size = 0x2000, scoped, tag = 'output window, operand 0, single buffered']
    %9 = vsyncpa [#allocation4], 0
    %10 = vsyncpa [#allocation7], 0
    %11 = vsyncpa [#allocation5], 0
    // Predicated region
    $region2: #{tpu_custom_call.1} parent=1 // pred_check
      _
    $region3: #{tpu_custom_call.1} parent=1 // pred_check_branch
      %13 = sbr.rel (0) target = $region5
    $region4: #{tpu_custom_call.1} parent=1 // pred_region
      _
    $region5: #{tpu_custom_call.1} parent=1 // pred_fallthru
      _
    // Predicated region
    $region6: #{tpu_custom_call.1} parent=1 // pred_check
      _
    $region7: #{tpu_custom_call.1} parent=1 // pred_check_branch
      %15 = sbr.rel (0) target = $region9
    $region8: #{tpu_custom_call.1} parent=1 // pred_region
      %s17 = ssub.s32 256, 256
      %18 = vsyncadd [#allocation4], %s17
      %s19 = sshll.u32 [#allocation3], 4
      %s20 = int_to_ptr.vmem [resolvable:$true] %s19
      %25 = dma.hbm_to_vmem [thread:$0]  %s1, 256, %s20, [#allocation4], 128, 128, 8
    $region9: #{tpu_custom_call.1} parent=1 // pred_fallthru
      _
    // Predicated region
    $region10: #{tpu_custom_call.1} parent=1 // pred_check
      _
    $region11: #{tpu_custom_call.1} parent=1 // pred_check_branch
      %27 = sbr.rel (0) target = $region13
    $region12: #{tpu_custom_call.1} parent=1 // pred_region
      %s29 = ssub.s32 256, 256
      %30 = vsyncadd [#allocation7], %s29
      %s31 = sshll.u32 [#allocation6], 4
      %s32 = int_to_ptr.vmem [resolvable:$true] %s31
      %37 = dma.hbm_to_vmem [thread:$0]  %s2, 256, %s32, [#allocation7], 128, 128, 8
    $region13: #{tpu_custom_call.1} parent=1 // pred_fallthru
      _
    // Predicated region
    $region14: #{tpu_custom_call.1} parent=1 // pred_check
      _
    $region15: #{tpu_custom_call.1} parent=1 // pred_check_branch
      %39 = sbr.rel (0) target = $region17
    $region16: #{tpu_custom_call.1} parent=1 // pred_region
      %40 = dma.done [#allocation4], 256
    $region17: #{tpu_custom_call.1} parent=1 // pred_fallthru
      _
    // Predicated region
    $region18: #{tpu_custom_call.1} parent=1 // pred_check
      _
    $region19: #{tpu_custom_call.1} parent=1 // pred_check_branch
      %42 = sbr.rel (0) target = $region21
    $region20: #{tpu_custom_call.1} parent=1 // pred_region
      %43 = dma.done [#allocation7], 256
    $region21: #{tpu_custom_call.1} parent=1 // pred_fallthru
      _
    %s44 = sld [smem:[#allocation2]]
    %v45 = vld [vmem:[#allocation3] sm:$0xff]
    %v46 = vld [vmem:[#allocation3 + $0x8] sm:$0xff]
    %v47 = vld [vmem:[#allocation6] sm:$0xff]
    %v48 = vld [vmem:[#allocation6 + $0x8] sm:$0xff]
    %v49 = vsub.f32 %v45, %v47
    %v50 = vsub.f32 %v46, %v48
    %v51 = vstv %s44
    %v52 = vmul.f32 %v49, %v51
    %v53 = vmul.f32 %v50, %v51
    %v54 = vadd.f32 %v47, %v52
    %v55 = vadd.f32 %v48, %v53
    %56 = vst [vmem:[#allocation8] sm:$0xff] %v54
    %57 = vst [vmem:[#allocation8 + $0x8] sm:$0xff] %v55
    // Predicated region
    $region22: #{tpu_custom_call.1} parent=1 // pred_check
      _
    $region23: #{tpu_custom_call.1} parent=1 // pred_check_branch
      %59 = sbr.rel (0) target = $region25
    $region24: #{tpu_custom_call.1} parent=1 // pred_region
      %s61 = ssub.s32 256, 256
      %62 = vsyncadd [#allocation5], %s61
      %s63 = sshll.u32 [#allocation8], 4
      %s64 = int_to_ptr.vmem [resolvable:$true] %s63
      %69 = dma.vmem_to_hbm [thread:$0]  %s64, 256, %s3, [#allocation5], 128, 128, 8
    $region25: #{tpu_custom_call.1} parent=1 // pred_fallthru
      _
    // Predicated region
    $region26: #{tpu_custom_call.1} parent=1 // pred_check
      _
    $region27: #{tpu_custom_call.1} parent=1 // pred_check_branch
      %71 = sbr.rel (0) target = $region29
    $region28: #{tpu_custom_call.1} parent=1 // pred_region
      %72 = dma.done [#allocation5], 256
    $region29: #{tpu_custom_call.1} parent=1 // pred_fallthru
      _
    %73 = vsyncpa [#allocation4], 1
    %74 = vsyncpa [#allocation7], 1
    %75 = vsyncpa [#allocation5], 1

</llo_original>
